<compile_context>
chip_gen: v6e
topology: v6e:2x2x1
jax: 0.10.0
libtpu: 0.0.40
codegen_flags: <defaults>
</compile_context>

<pallas_src>
import math

import jax
import jax.numpy as jnp
from jax.experimental import pallas as pl
from jax.experimental.pallas import tpu as pltpu


def _lovasz_tile_kernel(last_ref, gts_ref, err_ref, gt_ref, out_ref, carry_ref):
    # last_ref : (nb,) int32 SMEM  last N-tile with any positive hinge error
    # gts_ref  : (bb, 1)           total positives per image
    # err_ref  : (bb, T)  f32      relu'd hinge errors, globally sorted descending
    # gt_ref   : (bb, T)  bf16     labels in {0,1}, co-sorted with the errors
    # out_ref  : (bb, 1)           per-image loss accumulator (resident across N)
    # carry_ref: (bb, 1)  VMEM     running cumulative sum of gt across N tiles
    bi = pl.program_id(0)
    ni = pl.program_id(1)

    @pl.when(ni == 0)
    def _():
        carry_ref[...] = jnp.zeros_like(carry_ref)
        out_ref[...] = jnp.zeros_like(out_ref)

    # Tiles past the last positive hinge error contribute exactly 0: skip them
    # (their DMA is also skipped because the index_map clamps to last_ref[bi]).
    @pl.when(ni <= last_ref[bi])
    def _():
        g = gt_ref[...].astype(jnp.float32)     # bf16 {0,1} stream -> f32
        err = err_ref[...]                      # already >= 0 (relu'd pre-sort)
        gts = gts_ref[...]
        bb, t = g.shape

        col = jax.lax.broadcasted_iota(jnp.int32, (bb, t), 1)

        # Inclusive prefix sum of g within the tile: Hillis-Steele scan,
        # log2(T) steps of XLU roll + VPU select/add.  Values are 0/1 -> exact
        # in f32 as long as each image has < 2^24 pixels.
        s = g
        d = 1
        while d < t:
            shifted = pltpu.roll(s, d, 1)       # shifted[:, i] = s[:, i - d (mod T)]
            s = s + jnp.where(col >= d, shifted, 0.0)
            d *= 2

        carry_old = carry_ref[...]              # cumsum of g over previous tiles
        cum = carry_old + s                     # global inclusive cumsum
        # Reuse the scan's last lane for the carry (no extra cross-lane reduce).
        carry_ref[...] = cum[:, t - 1:t]

        # 1-based global position of each pixel in the sorted order (int32 math,
        # converted to f32 only for the divide; exact for positions < 2^24).
        idx = (col + ni * t + 1).astype(jnp.float32)

        # jac_i  = idx / den_i        with den_i = gts + idx - cum_i   (>= 1)
        # grad_i = jac_i - jac_{i-1}  which algebraically reduces to
        #   grad_i = (gts - cum_i + idx * g_i) / (den_i * den_prev_i),
        #   den_prev_i = den_i - 1 + g_i  (== union at position i-1).
        # den_prev == 0 only at idx==1 with gts==0; there the correct grad is
        # jac_1 = 1/den_1, so patch numerator/denominator for that single case.
        den = gts + idx - cum
        den_prev = den - 1.0 + g
        first_empty = den_prev == 0.0
        num = jnp.where(first_empty, 1.0, gts - cum + idx * g)
        denom = den * jnp.where(first_empty, 1.0, den_prev)
        grad = num / denom                      # single f32 divide per element

        out_ref[...] += jnp.sum(err * grad, axis=-1, keepdims=True)


def lovasz_hinge_pallas(logit, truth, per_image=True, tile_n=8192):
    assert tile_n % 128 == 0, "tile_n must be a multiple of 128 (lane width)"
    B0 = logit.shape[0]
    lg = logit.reshape(B0, -1).astype(jnp.float32)
    gt = truth.reshape(B0, -1).astype(jnp.float32)
    if not per_image:
        # TODO(synk): flat-loss semantics (one "image" of B*N pixels), matching
        # canonical lovasz_hinge(per_image=False); NOT the mean of per-image losses.
        lg = lg.reshape(1, -1)
        gt = gt.reshape(1, -1)
    B, N = lg.shape

    signs = 2.0 * gt - 1.0
    # Relu BEFORE sorting: err<=0 elements contribute exactly 0 wherever they
    # land and the relative order of err>0 elements is unchanged, so the loss is
    # identical -- and the kernel can skip the relu and the all-zero tail tiles.
    errors = jnp.maximum(1.0 - lg * signs, 0.0)
    gts = jnp.sum(gt, axis=-1, keepdims=True)            # (B, 1), sort-invariant

    # ---- tiling ---------------------------------------------------------------
    T = min(tile_n, ((N + 127) // 128) * 128)            # lane tile
    n_pad = ((N + T - 1) // T) * T
    if n_pad != N:
        errors = jnp.pad(errors, ((0, 0), (0, n_pad - N)))   # 0 == relu'd pad
        gt = jnp.pad(gt, ((0, 0), (0, n_pad - N)))

    # TODO(synk): the descending sort has no in-kernel Pallas TPU equivalent; one
    # jax.lax.sort co-sorts the bf16 labels with the relu'd error keys.
    neg_sorted, gt_sorted = jax.lax.sort(
        (-errors, gt.astype(jnp.bfloat16)), dimension=-1, num_keys=1)
    err_sorted = -neg_sorted

    # Pad batch to a multiple of 16 (clean bf16 sublane packing); padded rows are
    # all-zero and excluded from the final mean.
    Bp = ((B + 15) // 16) * 16
    if Bp != B:
        err_sorted = jnp.pad(err_sorted, ((0, Bp - B), (0, 0)))
        gt_sorted = jnp.pad(gt_sorted, ((0, Bp - B), (0, 0)))
        gts = jnp.pad(gts, ((0, Bp - B), (0, 0)))

    # bb: biggest batch tile (<= 32) dividing Bp while keeping >= 2 steps on the
    # "parallel" batch axis when Bp allows it (v7x megacore).
    bb = 32 if (Bp % 32 == 0 and Bp >= 64) else 16
    nb = Bp // bb
    nt = n_pad // T

    # Per batch-block index of the last N-tile containing any positive hinge
    # error; later tiles are DMA- and compute-skipped in the kernel.
    npos = jnp.sum((errors > 0.0).astype(jnp.int32), axis=-1)        # (B,)
    npos = jnp.pad(npos, (0, Bp - B))
    last_tile = jnp.max(
        jnp.clip((npos + T - 1) // T - 1, 0, nt - 1).reshape(nb, bb), axis=-1
    ).astype(jnp.int32)                                               # (nb,)

    log2t = max(1, int(math.log2(T)))
    cost = pl.CostEstimate(
        flops=int(Bp * n_pad * (3 * log2t + 10)),
        transcendentals=0,
        bytes_accessed=int(Bp * n_pad * 6 + 16 * Bp),
    )

    per_img = pl.pallas_call(
        _lovasz_tile_kernel,
        out_shape=jax.ShapeDtypeStruct((Bp, 1), jnp.float32),
        grid_spec=pltpu.PrefetchScalarGridSpec(
            num_scalar_prefetch=1,
            grid=(nb, nt),
            in_specs=[
                pl.BlockSpec((bb, 1), lambda bi, ni, last: (bi, 0)),       # gts
                pl.BlockSpec((bb, T),                                      # errors
                             lambda bi, ni, last: (bi, jnp.minimum(ni, last[bi]))),
                pl.BlockSpec((bb, T),                                      # labels
                             lambda bi, ni, last: (bi, jnp.minimum(ni, last[bi]))),
            ],
            out_specs=pl.BlockSpec((bb, 1), lambda bi, ni, last: (bi, 0)),
            scratch_shapes=[pltpu.VMEM((bb, 1), jnp.float32)],   # cumsum carry
        ),
        compiler_params=pltpu.CompilerParams(
            dimension_semantics=("parallel", "arbitrary"),
            vmem_limit_bytes=32 * 1024 * 1024,   # explicit headroom (v5e default=16 MiB)
        ),
        cost_estimate=cost,
    )(last_tile, gts, err_sorted, gt_sorted)

    return jnp.mean(per_img[:B, 0])


def lovasz_hinge_ref(logit, truth, per_image=True):
    """Pure-JAX reference (mirrors the canonical PyTorch lovasz_hinge)."""
    B = logit.shape[0]
    lg = logit.reshape(B, -1).astype(jnp.float32)
    gt = truth.reshape(B, -1).astype(jnp.float32)
    if not per_image:
        lg = lg.reshape(1, -1)
        gt = gt.reshape(1, -1)

    def per_row(l, g):
        signs = 2.0 * g - 1.0
        errors = 1.0 - l * signs
        perm = jnp.argsort(-errors)
        es = errors[perm]
        gs = g[perm]
        gts_ = gs.sum()
        inter = gts_ - jnp.cumsum(gs)
        union = gts_ + jnp.cumsum(1.0 - gs)
        jac = 1.0 - inter / union
        grad = jnp.concatenate([jac[:1], jac[1:] - jac[:-1]])
        return jnp.dot(jax.nn.relu(es), grad)

    return jnp.mean(jax.vmap(per_row)(lg, gt))


if __name__ == "__main__":
    key = jax.random.PRNGKey(0)
    k1, k2, k3, k4 = jax.random.split(key, 4)

    # binary-segmentation style inputs: NCHW with C=1  ->  N = 256 pixels/image
    logit = jax.random.normal(k1, (2, 1, 16, 16), dtype=jnp.float32)
    truth = (jax.random.uniform(k2, (2, 1, 16, 16)) > 0.5).astype(jnp.float32)

    # tile_n=128 so N=256 exercises the cross-tile carried cumsum (2 N-tiles)
    # and the scalar-prefetch tail-skip machinery.
    loss = lovasz_hinge_pallas(logit, truth, per_image=True, tile_n=128)
    jax.block_until_ready(loss)
    ref = lovasz_hinge_ref(logit, truth, per_image=True)
    assert jnp.allclose(loss, ref, rtol=1e-4, atol=1e-5), (float(loss), float(ref))

    # edge case: one image with no positive pixels (exercises the gts==0 guard).
    truth2 = truth.at[1].set(0.0)
    loss2 = lovasz_hinge_pallas(logit, truth2, per_image=True, tile_n=128)
    jax.block_until_ready(loss2)
    ref2 = lovasz_hinge_ref(logit, truth2, per_image=True)
    assert jnp.allclose(loss2, ref2, rtol=1e-4, atol=1e-5), (float(loss2), float(ref2))

    # default (large-tile) path: non-multiple-of-16 batch, single big N tile.
    logit3 = jax.random.normal(k3, (3, 1, 32, 32), dtype=jnp.float32)
    truth3 = (jax.random.uniform(k4, (3, 1, 32, 32)) > 0.5).astype(jnp.float32)
    loss3 = lovasz_hinge_pallas(logit3, truth3, per_image=True)
    jax.block_until_ready(loss3)
    ref3 = lovasz_hinge_ref(logit3, truth3, per_image=True)
    assert jnp.allclose(loss3, ref3, rtol=1e-4, atol=1e-5), (float(loss3), float(ref3))

    print("KERNEL_OK")
</pallas_src>

<mosaic_0001>
module attributes {stable_mosaic.version = 11 : i64} {
  func.func @_lovasz_tile_kernel(%arg0: i32, %arg1: i32, %arg2: memref<1xi32, #tpu.memory_space<smem>>, %arg3: memref<16x1xf32, #tpu.memory_space<vmem>>, %arg4: memref<16x128xf32, #tpu.memory_space<vmem>>, %arg5: memref<16x128xbf16, #tpu.memory_space<vmem>>, %arg6: memref<16x1xf32, #tpu.memory_space<vmem>>, %arg7: memref<16x1xf32, #tpu.memory_space<vmem>>) attributes {dimension_semantics = [#tpu.dimension_semantics<parallel>, #tpu.dimension_semantics<arbitrary>], iteration_bounds = array<i64: 1, 2>, scalar_prefetch = 1 : i64, scratch_operands = 1 : i64, tpu.core_type = #tpu.core_type<tc>, window_params = [{transform_indices = @transform_0, window_bounds = array<i64: 16, 1>}, {transform_indices = @transform_1, window_bounds = array<i64: 16, 128>}, {transform_indices = @transform_2, window_bounds = array<i64: 16, 128>}, {transform_indices = @transform_3, window_bounds = array<i64: 16, 1>}]} {
    %c0_i32 = arith.constant 0 : i32
    %0 = arith.cmpi eq, %arg1, %c0_i32 : i32
    %1 = arith.extui %0 : i1 to i32
    %c0_i32_0 = arith.constant 0 : i32
    %2 = arith.cmpi ne, %1, %c0_i32_0 : i32
    scf.if %2 {
      %cst = arith.constant 0.000000e+00 : f32
      %8 = vector.broadcast %cst : f32 to vector<16x1xf32>
      %c0 = arith.constant 0 : index
      %c0_2 = arith.constant 0 : index
      %9 = vector.load %arg7[%c0, %c0_2] : memref<16x1xf32, #tpu.memory_space<vmem>>, vector<16x1xf32>
      tpu.vector_store %arg7[%c0, %c0_2], %8 {strides = array<i32>} : memref<16x1xf32, #tpu.memory_space<vmem>>, vector<16x1xf32>,
      %cst_3 = arith.constant 0.000000e+00 : f32
      %10 = vector.broadcast %cst_3 : f32 to vector<16x1xf32>
      %c0_4 = arith.constant 0 : index
      %c0_5 = arith.constant 0 : index
      %11 = vector.load %arg6[%c0_4, %c0_5] : memref<16x1xf32, #tpu.memory_space<vmem>>, vector<16x1xf32>
      tpu.vector_store %arg6[%c0_4, %c0_5], %10 {strides = array<i32>} : memref<16x1xf32, #tpu.memory_space<vmem>>, vector<16x1xf32>,
    } else {
    }
    %3 = arith.index_cast %arg0 : i32 to index
    %4 = memref.load %arg2[%3] : memref<1xi32, #tpu.memory_space<smem>>
    %5 = arith.cmpi sle, %arg1, %4 : i32
    %6 = arith.extui %5 : i1 to i32
    %c0_i32_1 = arith.constant 0 : i32
    %7 = arith.cmpi ne, %6, %c0_i32_1 : i32
    scf.if %7 {
      %c0 = arith.constant 0 : index
      %c0_2 = arith.constant 0 : index
      %8 = vector.load %arg5[%c0, %c0_2] : memref<16x128xbf16, #tpu.memory_space<vmem>>, vector<16x128xbf16>
      %9 = arith.extf %8 : vector<16x128xbf16> to vector<16x128xf32>
      %c0_3 = arith.constant 0 : index
      %c0_4 = arith.constant 0 : index
      %10 = vector.load %arg4[%c0_3, %c0_4] : memref<16x128xf32, #tpu.memory_space<vmem>>, vector<16x128xf32>
      %c0_5 = arith.constant 0 : index
      %c0_6 = arith.constant 0 : index
      %11 = vector.load %arg3[%c0_5, %c0_6] : memref<16x1xf32, #tpu.memory_space<vmem>>, vector<16x1xf32>
      %12 = tpu.iota {dimensions = array<i32: 1>} : vector<16x128xi32>
      %c1_i32 = arith.constant 1 : i32
      %13 = tpu.dynamic_rotate %9 by %c1_i32 dim 1 : vector<16x128xf32>, i32 -> vector<16x128xf32>
      %c1_i32_7 = arith.constant 1 : i32
      %14 = vector.broadcast %c1_i32_7 : i32 to vector<16x128xi32>
      %15 = arith.cmpi sge, %12, %14 : vector<16x128xi32>
      %cst = arith.constant 0.000000e+00 : f32
      %16 = vector.broadcast %cst : f32 to vector<16x128xf32>
      %17 = arith.select %15, %13, %16 : vector<16x128xi1>, vector<16x128xf32>
      %18 = arith.addf %9, %17 : vector<16x128xf32>
      %c2_i32 = arith.constant 2 : i32
      %19 = tpu.dynamic_rotate %18 by %c2_i32 dim 1 : vector<16x128xf32>, i32 -> vector<16x128xf32>
      %c2_i32_8 = arith.constant 2 : i32
      %20 = vector.broadcast %c2_i32_8 : i32 to vector<16x128xi32>
      %21 = arith.cmpi sge, %12, %20 : vector<16x128xi32>
      %cst_9 = arith.constant 0.000000e+00 : f32
      %22 = vector.broadcast %cst_9 : f32 to vector<16x128xf32>
      %23 = arith.select %21, %19, %22 : vector<16x128xi1>, vector<16x128xf32>
      %24 = arith.addf %18, %23 : vector<16x128xf32>
      %c4_i32 = arith.constant 4 : i32
      %25 = tpu.dynamic_rotate %24 by %c4_i32 dim 1 : vector<16x128xf32>, i32 -> vector<16x128xf32>
      %c4_i32_10 = arith.constant 4 : i32
      %26 = vector.broadcast %c4_i32_10 : i32 to vector<16x128xi32>
      %27 = arith.cmpi sge, %12, %26 : vector<16x128xi32>
      %cst_11 = arith.constant 0.000000e+00 : f32
      %28 = vector.broadcast %cst_11 : f32 to vector<16x128xf32>
      %29 = arith.select %27, %25, %28 : vector<16x128xi1>, vector<16x128xf32>
      %30 = arith.addf %24, %29 : vector<16x128xf32>
      %c8_i32 = arith.constant 8 : i32
      %31 = tpu.dynamic_rotate %30 by %c8_i32 dim 1 : vector<16x128xf32>, i32 -> vector<16x128xf32>
      %c8_i32_12 = arith.constant 8 : i32
      %32 = vector.broadcast %c8_i32_12 : i32 to vector<16x128xi32>
      %33 = arith.cmpi sge, %12, %32 : vector<16x128xi32>
      %cst_13 = arith.constant 0.000000e+00 : f32
      %34 = vector.broadcast %cst_13 : f32 to vector<16x128xf32>
      %35 = arith.select %33, %31, %34 : vector<16x128xi1>, vector<16x128xf32>
      %36 = arith.addf %30, %35 : vector<16x128xf32>
      %c16_i32 = arith.constant 16 : i32
      %37 = tpu.dynamic_rotate %36 by %c16_i32 dim 1 : vector<16x128xf32>, i32 -> vector<16x128xf32>
      %c16_i32_14 = arith.constant 16 : i32
      %38 = vector.broadcast %c16_i32_14 : i32 to vector<16x128xi32>
      %39 = arith.cmpi sge, %12, %38 : vector<16x128xi32>
      %cst_15 = arith.constant 0.000000e+00 : f32
      %40 = vector.broadcast %cst_15 : f32 to vector<16x128xf32>
      %41 = arith.select %39, %37, %40 : vector<16x128xi1>, vector<16x128xf32>
      %42 = arith.addf %36, %41 : vector<16x128xf32>
      %c32_i32 = arith.constant 32 : i32
      %43 = tpu.dynamic_rotate %42 by %c32_i32 dim 1 : vector<16x128xf32>, i32 -> vector<16x128xf32>
      %c32_i32_16 = arith.constant 32 : i32
      %44 = vector.broadcast %c32_i32_16 : i32 to vector<16x128xi32>
      %45 = arith.cmpi sge, %12, %44 : vector<16x128xi32>
      %cst_17 = arith.constant 0.000000e+00 : f32
      %46 = vector.broadcast %cst_17 : f32 to vector<16x128xf32>
      %47 = arith.select %45, %43, %46 : vector<16x128xi1>, vector<16x128xf32>
      %48 = arith.addf %42, %47 : vector<16x128xf32>
      %c64_i32 = arith.constant 64 : i32
      %49 = tpu.dynamic_rotate %48 by %c64_i32 dim 1 : vector<16x128xf32>, i32 -> vector<16x128xf32>
      %c64_i32_18 = arith.constant 64 : i32
      %50 = vector.broadcast %c64_i32_18 : i32 to vector<16x128xi32>
      %51 = arith.cmpi sge, %12, %50 : vector<16x128xi32>
      %cst_19 = arith.constant 0.000000e+00 : f32
      %52 = vector.broadcast %cst_19 : f32 to vector<16x128xf32>
      %53 = arith.select %51, %49, %52 : vector<16x128xi1>, vector<16x128xf32>
      %54 = arith.addf %48, %53 : vector<16x128xf32>
      %c0_20 = arith.constant 0 : index
      %c0_21 = arith.constant 0 : index
      %55 = vector.load %arg7[%c0_20, %c0_21] : memref<16x1xf32, #tpu.memory_space<vmem>>, vector<16x1xf32>
      %56 = vector.broadcast %55 : vector<16x1xf32> to vector<16x128xf32>
      %57 = arith.addf %56, %54 : vector<16x128xf32>
      %58 = vector.extract_strided_slice %57 {offsets = [0, 127], sizes = [16, 1], strides = [1, 1]} : vector<16x128xf32> to vector<16x1xf32>
      %c0_22 = arith.constant 0 : index
      %c0_23 = arith.constant 0 : index
      %59 = vector.load %arg7[%c0_22, %c0_23] : memref<16x1xf32, #tpu.memory_space<vmem>>, vector<16x1xf32>
      tpu.vector_store %arg7[%c0_22, %c0_23], %58 {strides = array<i32>} : memref<16x1xf32, #tpu.memory_space<vmem>>, vector<16x1xf32>,
      %c128_i32 = arith.constant 128 : i32
      %60 = arith.muli %arg1, %c128_i32 : i32
      %61 = vector.broadcast %60 : i32 to vector<16x128xi32>
      %62 = arith.addi %12, %61 : vector<16x128xi32>
      %c1_i32_24 = arith.constant 1 : i32
      %63 = vector.broadcast %c1_i32_24 : i32 to vector<16x128xi32>
      %64 = arith.addi %62, %63 : vector<16x128xi32>
      %65 = arith.sitofp %64 : vector<16x128xi32> to vector<16x128xf32>
      %66 = vector.broadcast %11 : vector<16x1xf32> to vector<16x128xf32>
      %67 = arith.addf %66, %65 : vector<16x128xf32>
      %68 = arith.subf %67, %57 : vector<16x128xf32>
      %cst_25 = arith.constant 1.000000e+00 : f32
      %69 = vector.broadcast %cst_25 : f32 to vector<16x128xf32>
      %70 = arith.subf %68, %69 : vector<16x128xf32>
      %71 = arith.addf %70, %9 : vector<16x128xf32>
      %cst_26 = arith.constant 0.000000e+00 : f32
      %72 = vector.broadcast %cst_26 : f32 to vector<16x128xf32>
      %73 = arith.cmpf oeq, %71, %72 : vector<16x128xf32>
      %74 = vector.broadcast %11 : vector<16x1xf32> to vector<16x128xf32>
      %75 = arith.subf %74, %57 : vector<16x128xf32>
      %76 = arith.mulf %65, %9 : vector<16x128xf32>
      %77 = arith.addf %75, %76 : vector<16x128xf32>
      %cst_27 = arith.constant 1.000000e+00 : f32
      %78 = vector.broadcast %cst_27 : f32 to vector<16x128xf32>
      %79 = arith.select %73, %78, %77 : vector<16x128xi1>, vector<16x128xf32>
      %cst_28 = arith.constant 1.000000e+00 : f32
      %80 = vector.broadcast %cst_28 : f32 to vector<16x128xf32>
      %81 = arith.select %73, %80, %71 : vector<16x128xi1>, vector<16x128xf32>
      %82 = arith.mulf %68, %81 : vector<16x128xf32>
      %83 = arith.divf %79, %82 : vector<16x128xf32>
      %c0_29 = arith.constant 0 : index
      %c0_30 = arith.constant 0 : index
      %84 = vector.load %arg6[%c0_29, %c0_30] : memref<16x1xf32, #tpu.memory_space<vmem>>, vector<16x1xf32>
      %85 = arith.mulf %10, %83 : vector<16x128xf32>
      %cst_31 = arith.constant dense<0.000000e+00> : vector<16xf32>
      %86 = vector.multi_reduction <add>, %85, %cst_31 [1] : vector<16x128xf32> to vector<16xf32>
      %87 = vector.shape_cast %86 : vector<16xf32> to vector<16x1xf32>
      %88 = arith.addf %84, %87 : vector<16x1xf32>
      %c0_32 = arith.constant 0 : index
      %c0_33 = arith.constant 0 : index
      %89 = vector.load %arg6[%c0_32, %c0_33] : memref<16x1xf32, #tpu.memory_space<vmem>>, vector<16x1xf32>
      tpu.vector_store %arg6[%c0_32, %c0_33], %88 {strides = array<i32>} : memref<16x1xf32, #tpu.memory_space<vmem>>, vector<16x1xf32>,
    } else {
    }
    return
  }
  func.func @transform_0(%arg0: i32, %arg1: i32, %arg2: memref<1xi32, #tpu.memory_space<smem>>) -> (i32, i32) {
    %c0_i32 = arith.constant 0 : i32
    %c0_i32_0 = arith.constant 0 : i32
    return %arg0, %c0_i32 : i32, i32
  }
  func.func @transform_1(%arg0: i32, %arg1: i32, %arg2: memref<1xi32, #tpu.memory_space<smem>>) -> (i32, i32) {
    %0 = arith.index_cast %arg0 : i32 to index
    %1 = memref.load %arg2[%0] : memref<1xi32, #tpu.memory_space<smem>>
    %2 = arith.minsi %arg1, %1 : i32
    %c0_i32 = arith.constant 0 : i32
    return %arg0, %2 : i32, i32
  }
  func.func @transform_2(%arg0: i32, %arg1: i32, %arg2: memref<1xi32, #tpu.memory_space<smem>>) -> (i32, i32) {
    %0 = arith.index_cast %arg0 : i32 to index
    %1 = memref.load %arg2[%0] : memref<1xi32, #tpu.memory_space<smem>>
    %2 = arith.minsi %arg1, %1 : i32
    %c0_i32 = arith.constant 0 : i32
    return %arg0, %2 : i32, i32
  }
  func.func @transform_3(%arg0: i32, %arg1: i32, %arg2: memref<1xi32, #tpu.memory_space<smem>>) -> (i32, i32) {
    %c0_i32 = arith.constant 0 : i32
    %c0_i32_0 = arith.constant 0 : i32
    return %arg0, %c0_i32 : i32, i32
  }
}

</mosaic_0001>

<llo_original>
// kernel: tpu_custom_call.1
$region0: #{tpu_custom_call.1}
  #allocation0 [shape = 'u32[]', space=smem, size = 0x4, offset = 0x4, fixed_abs, tag = 'smem constant byte address 0x4 - core index']
  #allocation1 [shape = 'u32[144,128]{1,0:T(1,128)}', space=vmem, size = 0x12000, scoped, tag = 'internal scratch']
  #allocation2 [shape = 'f32[16,1]{1,0:T(8,128)}', space=vmem, size = 0x2000, scoped, tag = 'scratch operand']
  #allocation3 [shape = 's32[1]{0}', space=sflag, size = 0x4, scoped, tag = 'scoped memory for tpu_custom_call.1']
  #allocation4 [shape = 's32[1]{0:T(128)S(6)}', space=smem, size = 0x200, scoped, tag = 'prefetched SMEM operand 0']
  %s0 = inlined_call_operand.<no memory space> [shape: s32[1], index: 0, kind: input, shape index: {}]
  %s1 = inlined_call_operand.vmem [shape: f32[16,1], index: 1, kind: input, shape index: {}]
  %s2 = inlined_call_operand.hbm [shape: f32[16,256], index: 2, kind: input, shape index: {}]
  %s3 = inlined_call_operand.vmem [shape: bf16[16,256], index: 3, kind: input, shape index: {}]
  %s4 = inlined_call_operand.vmem [shape: f32[16,1], index: 4, kind: output, shape index: {}]
  %s5 = sld [smem:[#allocation0]]
  $region98: #{tpu_custom_call.1} parent=0
    _
  %s7 = ssub.s32 1, %s5
  %s8 = scalar_select 0, %s7, %s5
  %9 = sst [smem:[#allocation4]] %s0
  $region1: #{tpu_custom_call.1} parent=0
    #allocation5 [shape = 'u8[16384]{0}', space=vmem, size = 0x4000, scoped, tag = 'input window, operand 2']
    #allocation6 [shape = 's32[2]{0}', space=sflag, size = 0x8, scoped, tag = 'scoped memory for tpu_custom_call.1']
    #allocation7 [shape = 'u8[8192]{0}', space=vmem, size = 0x2000, scoped, tag = 'input window, operand 3']
    %10 = vsyncpa [#allocation6], 0
    %s11 = scalar_lea.sflag [#allocation6], 1
    %12 = vsyncpa %s11, 0
    loop: start=0, step=1, limit=4
    $region2: #{tpu_custom_call.1} parent=1 // loop_pre_header
      _
    $region3: #{tpu_custom_call.1} parent=1 // loop_header
      %s14 = sphi 0, %s18
      %p15 = scmp.ge.s32.totalorder %s14, 4
      %s21 = sphi 0, %s33
      %s22 = sphi 0, %s29
      %s23 = sphi 0, %s21
      %s24 = sphi 0, %s22
      %s25 = sphi 0, %s23
      %s26 = sphi 0, %s24
      %s36 = sphi 0, %s38
      %s39 = sphi 0, %s36
      %s40 = sphi 0, %s39
      %s56 = sphi 0, %s40
      %s70 = sphi 0, %s72
      %s73 = sphi 0, %s70
      %s74 = sphi 0, %s73
      %s90 = sphi 0, %s74
      %s104 = sphi 0, %s106
      %s107 = sphi 0, %s104
      %s108 = sphi 0, %s107
      %s124 = sphi 0, %s108
      %s130 = sphi 0, %s132
      %s133 = sphi 0, %s130
      %s134 = sphi 0, %s133
      %s150 = sphi 0, %s134
    $region4: #{tpu_custom_call.1} parent=1 // loop_header_branch
      %17 = sbr.rel (%p15) target = $region8
    $region5: #{tpu_custom_call.1} parent=1 // loop_body
      %s19 = ssub.s32 %s14, 1
      %s20 = ssub.s32 %s14, 2
      %s27 = sadd.s32 1, %s22
      %p28 = scmp.ge.s32.totalorder %s27, 2
      %s29 = scalar_select %p28, 0, %s27
      %s30 = sadd.s32 1, %s21
      %s31 = scalar_select %p28, %s30, %s21
      %p32 = scmp.ge.s32.totalorder %s31, 1
      %s33 = scalar_select %p32, 0, %s31
      %s34 = ssub.s32 %s21, %s33
      %p35 = scmp.eq.s32.totalorder %s34, 0
      %s37 = sadd.s32 %s36, 1
      %s38 = scalar_select %p35, %s36, %s37
      %p41 = pneg %p35
      %p42 = scmp.eq.s32.totalorder %s14, 1
      %p43 = por %p41, %p42
      %p44 = scmp.ne.s32.totalorder %s36, %s39
      %p45 = scmp.eq.s32.totalorder %s14, 0
      %p46 = por %p44, %p45
      %p47 = scmp.ne.s32.totalorder %s36, %s39
      %p48 = scmp.eq.s32.totalorder %s19, 1
      %p49 = por %p47, %p48
      %p50 = scmp.ne.s32.totalorder %s39, %s40
      %p51 = scmp.eq.s32.totalorder %s19, 0
      %p52 = por %p50, %p51
      %p53 = scmp.ne.s32.totalorder %s39, %s40
      %p54 = scmp.eq.s32.totalorder %s20, 1
      %p55 = por %p53, %p54
      %p57 = scmp.ne.s32.totalorder %s40, %s56
      %p58 = scmp.eq.s32.totalorder %s20, 0
      %p59 = por %p57, %p58
      %s60 = sld [smem:[#allocation4 + %s21]]
      %p61 = scmp.lt.s32.totalorder %s22, %s60
      %s62 = scalar_select %p61, %s22, %s60
      %s63 = sld [smem:[#allocation4 + %s33]]
      %p64 = scmp.lt.s32.totalorder %s29, %s63
      %s65 = scalar_select %p64, %s29, %s63
      %s66 = ssub.s32 %s21, %s33
      %s67 = ssub.s32 %s62, %s65
      %s68 = sor.u32 %s66, %s67
      %p69 = scmp.eq.s32.totalorder %s68, 0
      %s71 = sadd.s32 %s70, 1
      %s72 = scalar_select %p69, %s70, %s71
      %p75 = pneg %p69
      %p76 = scmp.eq.s32.totalorder %s14, 1
      %p77 = por %p75, %p76
      %p78 = scmp.ne.s32.totalorder %s70, %s73
      %p79 = scmp.eq.s32.totalorder %s14, 0
      %p80 = por %p78, %p79
      %p81 = scmp.ne.s32.totalorder %s70, %s73
      %p82 = scmp.eq.s32.totalorder %s19, 1
      %p83 = por %p81, %p82
      %p84 = scmp.ne.s32.totalorder %s73, %s74
      %p85 = scmp.eq.s32.totalorder %s19, 0
      %p86 = por %p84, %p85
      %p87 = scmp.ne.s32.totalorder %s73, %s74
      %p88 = scmp.eq.s32.totalorder %s20, 1
      %p89 = por %p87, %p88
      %p91 = scmp.ne.s32.totalorder %s74, %s90
      %p92 = scmp.eq.s32.totalorder %s20, 0
      %p93 = por %p91, %p92
      %s94 = sld [smem:[#allocation4 + %s21]]
      %p95 = scmp.lt.s32.totalorder %s22, %s94
      %s96 = scalar_select %p95, %s22, %s94
      %s97 = sld [smem:[#allocation4 + %s33]]
      %p98 = scmp.lt.s32.totalorder %s29, %s97
      %s99 = scalar_select %p98, %s29, %s97
      %s100 = ssub.s32 %s21, %s33
      %s101 = ssub.s32 %s96, %s99
      %s102 = sor.u32 %s100, %s101
      %p103 = scmp.eq.s32.totalorder %s102, 0
      %s105 = sadd.s32 %s104, 1
      %s106 = scalar_select %p103, %s104, %s105
      %p109 = pneg %p103
      %p110 = scmp.eq.s32.totalorder %s14, 1
      %p111 = por %p109, %p110
      %p112 = scmp.ne.s32.totalorder %s104, %s107
      %p113 = scmp.eq.s32.totalorder %s14, 0
      %p114 = por %p112, %p113
      %p115 = scmp.ne.s32.totalorder %s104, %s107
      %p116 = scmp.eq.s32.totalorder %s19, 1
      %p117 = por %p115, %p116
      %p118 = scmp.ne.s32.totalorder %s107, %s108
      %p119 = scmp.eq.s32.totalorder %s19, 0
      %p120 = por %p118, %p119
      %p121 = scmp.ne.s32.totalorder %s107, %s108
      %p122 = scmp.eq.s32.totalorder %s20, 1
      %p123 = por %p121, %p122
      %p125 = scmp.ne.s32.totalorder %s108, %s124
      %p126 = scmp.eq.s32.totalorder %s20, 0
      %p127 = por %p125, %p126
      %s128 = ssub.s32 %s21, %s33
      %p129 = scmp.eq.s32.totalorder %s128, 0
      %s131 = sadd.s32 %s130, 1
      %s132 = scalar_select %p129, %s130, %s131
      %p135 = pneg %p129
      %p136 = scmp.eq.s32.totalorder %s14, 1
      %p137 = por %p135, %p136
      %p138 = scmp.ne.s32.totalorder %s130, %s133
      %p139 = scmp.eq.s32.totalorder %s14, 0
      %p140 = por %p138, %p139
      %p141 = scmp.ne.s32.totalorder %s130, %s133
      %p142 = scmp.eq.s32.totalorder %s19, 1
      %p143 = por %p141, %p142
      %p144 = scmp.ne.s32.totalorder %s133, %s134
      %p145 = scmp.eq.s32.totalorder %s19, 0
      %p146 = por %p144, %p145
      %p147 = scmp.ne.s32.totalorder %s133, %s134
      %p148 = scmp.eq.s32.totalorder %s20, 1
      %p149 = por %p147, %p148
      %p151 = scmp.ne.s32.totalorder %s134, %s150
      %p152 = scmp.eq.s32.totalorder %s20, 0
      %p153 = por %p151, %p152
      %p154 = scmp.le.s32.totalorder 1, %s14
      %p155 = scmp.lt.s32.totalorder %s14, 3
      %p156 = pnand %p154, %p155
      %p157 = pneg %p156
      // Predicated region
      $region9: #{tpu_custom_call.1} parent=5 // pred_check
        _
      $region10: #{tpu_custom_call.1} parent=5 // pred_check_branch
        %159 = sbr.rel (%p156) target = $region12
      $region11: #{tpu_custom_call.1} parent=5 // pred_region
        %s160 = ssub.s32 %s14, 1
        // Predicated region
        $region13: #{tpu_custom_call.1} parent=11 // pred_check
          %p161 = pneg %p52
        $region14: #{tpu_custom_call.1} parent=11 // pred_check_branch
          %163 = sbr.rel (%p161) target = $region16
        $region15: #{tpu_custom_call.1} parent=11 // pred_region
          %s164 = smul.u32 2, %s23
          %p165 = scmp.lt.s32.totalorder %s164, 1
          %s166 = scalar_select %p165, %s164, 1
          %s167 = smul.addr %s166, 8
          %s168 = scalar_lea.vmem %s1, %s167
          %s169 = smul.u32 2, %s23
        $region16: #{tpu_custom_call.1} parent=11 // pred_fallthru
          _
      $region12: #{tpu_custom_call.1} parent=5 // pred_fallthru
        _
      %p170 = scmp.lt.s32.totalorder %s14, 2
      // Predicated region
      $region17: #{tpu_custom_call.1} parent=5 // pred_check
        %p171 = pneg %p170
      $region18: #{tpu_custom_call.1} parent=5 // pred_check_branch
        %173 = sbr.rel (%p171) target = $region20
      $region19: #{tpu_custom_call.1} parent=5 // pred_region
        // Predicated region
        $region21: #{tpu_custom_call.1} parent=19 // pred_check
          %p174 = pneg %p80
        $region22: #{tpu_custom_call.1} parent=19 // pred_check_branch
          %176 = sbr.rel (%p174) target = $region24
        $region23: #{tpu_custom_call.1} parent=19 // pred_region
          %s177 = sand.u32 %s70, 1
          %s178 = scalar_lea.sflag [#allocation6], %s177
          %s179 = sand.u32 %s70, 1
          %s180 = smul.addr %s179, 16
          %s181 = scalar_lea.vmem [#allocation5], %s180
          %s182 = sld [smem:[#allocation4 + %s21]]
          %p183 = scmp.lt.s32.totalorder %s22, %s182
          %s184 = scalar_select %p183, %s22, %s182
          %s185 = smul.u32 2, %s21
          %s187 = ssub.s32 256, 256
          %188 = vsyncadd %s178, %s187
          %s189 = smul.addr %s185, 2
          %s190 = sadd.s32 %s184, %s189
          %s191 = smul.addr %s190, 128
          %s192 = scalar_lea.hbm %s2, %s191
          %s193 = sshll.u32 %s181, 4
          %s194 = int_to_ptr.vmem [resolvable:$true] %s193
          %199 = dma.hbm_to_vmem [thread:$0]  %s192, 256, %s194, %s178, 256, 128, 8
        $region24: #{tpu_custom_call.1} parent=19 // pred_fallthru
          _
        // Predicated region
        $region25: #{tpu_custom_call.1} parent=19 // pred_check
          %p200 = pneg %p114
        $region26: #{tpu_custom_call.1} parent=19 // pred_check_branch
          %202 = sbr.rel (%p200) target = $region28
        $region27: #{tpu_custom_call.1} parent=19 // pred_region
          %s203 = sand.u32 %s104, 1
          %s204 = sand.u32 %s104, 1
          %s205 = smul.addr %s204, 8
          %s206 = scalar_lea.vmem [#allocation7], %s205
          %s207 = sld [smem:[#allocation4 + %s21]]
          %p208 = scmp.lt.s32.totalorder %s22, %s207
          %s209 = scalar_select %p208, %s22, %s207
          %s210 = smul.u32 2, %s21
          %s211 = smul.addr %s210, 2
          %s212 = sadd.s32 %s209, %s211
          %s213 = smul.addr %s212, 4
          %s214 = scalar_lea.vmem %s3, %s213
          // Predicated region
          $region29: #{tpu_custom_call.1} parent=27 // pred_check
            _
          $region30: #{tpu_custom_call.1} parent=27 // pred_check_branch
            %216 = sbr.rel (0) target = $region32
          $region31: #{tpu_custom_call.1} parent=27 // pred_region
            // Predicated region
            $region33: #{tpu_custom_call.1} parent=31 // pred_check
              _
            $region34: #{tpu_custom_call.1} parent=31 // pred_check_branch
              %218 = sbr.rel target = $region36
            $region35: #{tpu_custom_call.1} parent=31 // pred_region
              // Predicated region
              $region48: #{tpu_custom_call.1} parent=35 // pred_check
                _
              $region49: #{tpu_custom_call.1} parent=35 // pred_check_branch
                %236 = sbr.rel (0) target = $region51
              $region50: #{tpu_custom_call.1} parent=35 // pred_region
                loop: start=0, step=1, limit=1
                $region52: #{tpu_custom_call.1} parent=50 // loop_pre_header
                  _
                $region53: #{tpu_custom_call.1} parent=50 // loop_header
                  %s238 = sphi 0, %s242
                  %p239 = scmp.ge.s32.totalorder %s238, 1
                  %s243 = sphi %s214, %s214
                  %s244 = sphi %s206, %s206
                $region54: #{tpu_custom_call.1} parent=50 // loop_header_branch
                  %241 = sbr.rel (%p239) target = $region58
                $region55: #{tpu_custom_call.1} parent=50 // loop_body
                  _
                $region56: #{tpu_custom_call.1} parent=50 // loop_footer
                  %s242 = sadd.s32 1, %s238
                $region57: #{tpu_custom_call.1} parent=50 // loop_footer_branch
                  %237 = sbr.rel target = $region53
                $region58: #{tpu_custom_call.1} parent=50 // loop_exit
                  _
                %s246 = ssub.s32 16, 1
                loop: start=0, step=1, limit=1
                $region59: #{tpu_custom_call.1} parent=50 // loop_pre_header
                  _
                $region60: #{tpu_custom_call.1} parent=50 // loop_header
                  %s248 = sphi 0, %s252
                  %p249 = scmp.ge.s32.totalorder %s248, 1
                  %s253 = sphi %s214, %s214
                  %s254 = sphi %s206, %s206
                $region61: #{tpu_custom_call.1} parent=50 // loop_header_branch
                  %251 = sbr.rel (%p249) target = $region65
                $region62: #{tpu_custom_call.1} parent=50 // loop_body
                  %v255 = vld [vmem:[%s253] sm:%s246]
                  %256 = vst [vmem:[%s254] sm:%s246] %v255
                  %v257 = vld [vmem:[%s253 + $0x8] sm:%s246]
                  %258 = vst [vmem:[%s254 + $0x4] sm:%s246] %v257
                $region63: #{tpu_custom_call.1} parent=50 // loop_footer
                  %s252 = sadd.s32 1, %s248
                $region64: #{tpu_custom_call.1} parent=50 // loop_footer_branch
                  %247 = sbr.rel target = $region60
                $region65: #{tpu_custom_call.1} parent=50 // loop_exit
                  _
              $region51: #{tpu_custom_call.1} parent=35 // pred_fallthru
                _
            $region36: #{tpu_custom_call.1} parent=31 // pred_fallthru
              _
            // Predicated region
            $region37: #{tpu_custom_call.1} parent=31 // pred_check
              _
            $region38: #{tpu_custom_call.1} parent=31 // pred_check_branch
              %220 = sbr.rel (0) target = $region40
            $region39: #{tpu_custom_call.1} parent=31 // pred_region
              %s222 = ssub.s32 16, 1
              loop: start=0, step=1, limit=1
              $region41: #{tpu_custom_call.1} parent=39 // loop_pre_header
                _
              $region42: #{tpu_custom_call.1} parent=39 // loop_header
                %s224 = sphi 0, %s228
                %p225 = scmp.ge.s32.totalorder %s224, 1
                %s229 = sphi %s214, %s214
                %s230 = sphi %s206, %s206
              $region43: #{tpu_custom_call.1} parent=39 // loop_header_branch
                %227 = sbr.rel (%p225) target = $region47
              $region44: #{tpu_custom_call.1} parent=39 // loop_body
                %v231 = vld [vmem:[%s229] sm:%s222]
                %232 = vst [vmem:[%s230] sm:%s222] %v231
                %v233 = vld [vmem:[%s229 + $0x8] sm:%s222]
                %234 = vst [vmem:[%s230 + $0x4] sm:%s222] %v233
              $region45: #{tpu_custom_call.1} parent=39 // loop_footer
                %s228 = sadd.s32 1, %s224
              $region46: #{tpu_custom_call.1} parent=39 // loop_footer_branch
                %223 = sbr.rel target = $region42
              $region47: #{tpu_custom_call.1} parent=39 // loop_exit
                _
            $region40: #{tpu_custom_call.1} parent=31 // pred_fallthru
              _
          $region32: #{tpu_custom_call.1} parent=27 // pred_fallthru
            _
          %259 = vnop
        $region28: #{tpu_custom_call.1} parent=19 // pred_fallthru
          _
      $region20: #{tpu_custom_call.1} parent=5 // pred_fallthru
        _
      %p260 = scmp.le.s32.totalorder 1, %s14
      %p261 = scmp.lt.s32.totalorder %s14, 3
      %p262 = pnand %p260, %p261
      %p263 = pneg %p262
      // Predicated region
      $region66: #{tpu_custom_call.1} parent=5 // pred_check
        _
      $region67: #{tpu_custom_call.1} parent=5 // pred_check_branch
        %265 = sbr.rel (%p262) target = $region69
      $region68: #{tpu_custom_call.1} parent=5 // pred_region
        %s266 = ssub.s32 %s14, 1
        %s267 = sand.u32 %s73, 1
        %s268 = scalar_lea.sflag [#allocation6], %s267
        %s269 = sand.u32 %s73, 1
        %s270 = smul.addr %s269, 16
        %s271 = scalar_lea.vmem [#allocation5], %s270
        // Predicated region
        $region70: #{tpu_custom_call.1} parent=68 // pred_check
          %p272 = pneg %p86
        $region71: #{tpu_custom_call.1} parent=68 // pred_check_branch
          %274 = sbr.rel (%p272) target = $region73
        $region72: #{tpu_custom_call.1} parent=68 // pred_region
          %275 = dma.done %s268, 256
        $region73: #{tpu_custom_call.1} parent=68 // pred_fallthru
          _
        %s276 = sand.u32 %s107, 1
        %s277 = sand.u32 %s107, 1
        %s278 = smul.addr %s277, 8
        %s279 = scalar_lea.vmem [#allocation7], %s278
        // Predicated region
        $region74: #{tpu_custom_call.1} parent=68 // pred_check
          %p280 = pneg %p120
        $region75: #{tpu_custom_call.1} parent=68 // pred_check_branch
          %282 = sbr.rel (%p280) target = $region77
        $region76: #{tpu_custom_call.1} parent=68 // pred_region
          _
        $region77: #{tpu_custom_call.1} parent=68 // pred_fallthru
          _
        %s283 = smul.u32 2, %s23
        %p284 = scmp.lt.s32.totalorder %s283, 1
        %s285 = scalar_select %p284, %s283, 1
        %s286 = smul.addr %s285, 8
        %s287 = scalar_lea.vmem %s1, %s286
        %p288 = pneg %p52
        %p289 = pneg %p49
        %s290 = sand.u32 %s73, 1
        %s291 = scalar_lea.sflag [#allocation6], %s290
        %s292 = sand.u32 %s73, 1
        %s293 = smul.addr %s292, 16
        %s294 = scalar_lea.vmem [#allocation5], %s293
        %p295 = pneg %p86
        %p296 = pneg %p83
        %s297 = sand.u32 %s107, 1
        %s298 = sand.u32 %s107, 1
        %s299 = smul.addr %s298, 8
        %s300 = scalar_lea.vmem [#allocation7], %s299
        %p301 = pneg %p120
        %p302 = pneg %p117
        %p303 = pneg %p146
        %p304 = pneg %p143
        %s305 = smul.u32 2, %s23
        %p306 = scmp.lt.s32.totalorder %s305, 1
        %s307 = scalar_select %p306, %s305, 1
        %s308 = smul.addr %s307, 8
        %s309 = scalar_lea.vmem %s4, %s308
        %s310 = smul.u32 2, %s23
        %p311 = scmp.lt.s32.totalorder %s310, 1
        %s312 = scalar_select %p311, %s310, 1
        %s313 = smul.addr %s312, 8
        %s314 = scalar_lea.vmem %s1, %s313
        %s315 = smul.u32 2, %s23
        %s316 = sld [smem:[#allocation4 + %s23]]
        %p317 = scmp.lt.s32.totalorder %s24, %s316
        %s318 = scalar_select %p317, %s24, %s316
        %s319 = smul.u32 2, %s23
        %s320 = sld [smem:[#allocation4 + %s23]]
        %p321 = scmp.lt.s32.totalorder %s24, %s320
        %s322 = scalar_select %p321, %s24, %s320
        %s323 = smul.u32 2, %s23
        %s324 = smul.u32 2, %s23
        %p325 = scmp.lt.s32.totalorder %s324, 1
        %s326 = scalar_select %p325, %s324, 1
        %s327 = smul.addr %s326, 8
        %s328 = scalar_lea.vmem %s4, %s327
        %s329 = smul.u32 2, %s23
        %p330 = scmp.eq.s32.totalorder %s24, 0
        // Predicated region
        $region78: #{tpu_custom_call.1} parent=68 // pred_check
          %p331 = pneg %p330
        $region79: #{tpu_custom_call.1} parent=68 // pred_check_branch
          %333 = sbr.rel (%p331) target = $region81
        $region80: #{tpu_custom_call.1} parent=68 // pred_region
          %vm334 = vcmask 7168
          %335 = vst.msk [vmem:[#allocation2] sm:$0xff] %vm334, 0.0
          %336 = vst.msk [vmem:[#allocation2 + $0x8] sm:$0xff] %vm334, 0.0
          %337 = vst.msk [vmem:[%s328] sm:$0xff] %vm334, 0.0
          %338 = vst.msk [vmem:[%s328 + $0x8] sm:$0xff] %vm334, 0.0
        $region81: #{tpu_custom_call.1} parent=68 // pred_fallthru
          _
        %s339 = sld [smem:[#allocation4 + %s23]]
        %p340 = scmp.le.s32.totalorder %s24, %s339
        // Predicated region
        $region82: #{tpu_custom_call.1} parent=68 // pred_check
          %p341 = pneg %p340
        $region83: #{tpu_custom_call.1} parent=68 // pred_check_branch
          %343 = sbr.rel (%p341) target = $region85
        $region84: #{tpu_custom_call.1} parent=68 // pred_region
          %v344 = vld [vmem:[%s279] sm:$0xf]
          %v345 = vld [vmem:[%s279 + $0x4] sm:$0xf]
          %v346 = vunpack.c.l.bf16 %v344
          %v347 = vunpack.c.l.bf16 %v345
          %v348 = vld [vmem:[%s271] sm:$0xff]
          %v349 = vld [vmem:[%s271 + $0x8] sm:$0xff]
          %v350 = vld [vmem:[%s314] sm:$0xff]
          %v351 = vld [vmem:[%s314 + $0x8] sm:$0xff]
          %v352 = vlaneseq
          %v353 = vand.u32 %v352, 127
          %354 = vrot.lane.b32.xlu0 %v346, 1
          %v355 = vpop.permute.xlu0 %354
          %356 = vrot.lane.b32.xlu0 %v347, 1
          %v357 = vpop.permute.xlu0 %356
          %vm358 = vcmp.ge.s32.totalorder %v353, 1
          %v359 = vsel %vm358, %v355, 0.0
          %v360 = vsel %vm358, %v357, 0.0
          %v361 = vadd.f32 %v346, %v359
          %v362 = vadd.f32 %v347, %v360
          %363 = vrot.lane.b32.xlu0 %v361, 2
          %v364 = vpop.permute.xlu0 %363
          %365 = vrot.lane.b32.xlu0 %v362, 2
          %v366 = vpop.permute.xlu0 %365
          %vm367 = vcmp.ge.s32.totalorder %v353, 2
          %v368 = vsel %vm367, %v364, 0.0
          %v369 = vsel %vm367, %v366, 0.0
          %v370 = vadd.f32 %v361, %v368
          %v371 = vadd.f32 %v362, %v369
          %372 = vrot.lane.b32.xlu0 %v370, 4
          %v373 = vpop.permute.xlu0 %372
          %374 = vrot.lane.b32.xlu0 %v371, 4
          %v375 = vpop.permute.xlu0 %374
          %vm376 = vcmp.ge.s32.totalorder %v353, 4
          %v377 = vsel %vm376, %v373, 0.0
          %v378 = vsel %vm376, %v375, 0.0
          %v379 = vadd.f32 %v370, %v377
          %v380 = vadd.f32 %v371, %v378
          %381 = vrot.lane.b32.xlu0 %v379, 8
          %v382 = vpop.permute.xlu0 %381
          %383 = vrot.lane.b32.xlu0 %v380, 8
          %v384 = vpop.permute.xlu0 %383
          %vm385 = vcmp.ge.s32.totalorder %v353, 8
          %v386 = vsel %vm385, %v382, 0.0
          %v387 = vsel %vm385, %v384, 0.0
          %v388 = vadd.f32 %v379, %v386
          %v389 = vadd.f32 %v380, %v387
          %390 = vrot.lane.b32.xlu0 %v388, 16
          %v391 = vpop.permute.xlu0 %390
          %392 = vrot.lane.b32.xlu0 %v389, 16
          %v393 = vpop.permute.xlu0 %392
          %vm394 = vcmp.ge.s32.totalorder %v353, 16
          %v395 = vsel %vm394, %v391, 0.0
          %v396 = vsel %vm394, %v393, 0.0
          %v397 = vadd.f32 %v388, %v395
          %v398 = vadd.f32 %v389, %v396
          %399 = vrot.lane.b32.xlu0 %v397, 32
          %v400 = vpop.permute.xlu0 %399
          %401 = vrot.lane.b32.xlu0 %v398, 32
          %v402 = vpop.permute.xlu0 %401
          %vm403 = vcmp.ge.s32.totalorder %v353, 32
          %v404 = vsel %vm403, %v400, 0.0
          %v405 = vsel %vm403, %v402, 0.0
          %v406 = vadd.f32 %v397, %v404
          %v407 = vadd.f32 %v398, %v405
          %408 = vrot.lane.b32.xlu0 %v406, 64
          %v409 = vpop.permute.xlu0 %408
          %410 = vrot.lane.b32.xlu0 %v407, 64
          %v411 = vpop.permute.xlu0 %410
          %vm412 = vcmp.ge.s32.totalorder %v353, 64
          %v413 = vsel %vm412, %v409, 0.0
          %v414 = vsel %vm412, %v411, 0.0
          %v415 = vadd.f32 %v406, %v413
          %v416 = vadd.f32 %v407, %v414
          %v417 = vld [vmem:[#allocation2] sm:$0xff]
          %v418 = vld [vmem:[#allocation2 + $0x8] sm:$0xff]
          %420 = vset.pattern.permute.xlu0 0
          %421 = vperm.xlu0 %420, %v417
          %v422 = vpop.permute.xlu0 %421
          %425 = vset.pattern.permute.xlu0 0
          %426 = vperm.xlu0 %425, %v418
          %v427 = vpop.permute.xlu0 %426
          %v429 = vadd.f32 %v422, %v415
          %v430 = vadd.f32 %v427, %v416
          %433 = vrot.lane.b32.xlu0 %v429, 1
          %v434 = vpop.permute.xlu0 %433
          %435 = vrot.lane.b32.xlu0 %v430, 1
          %v436 = vpop.permute.xlu0 %435
          %vm439 = vcmask 7168
          %440 = vst.msk [vmem:[#allocation2] sm:$0xff] %vm439, %v434
          %441 = vst.msk [vmem:[#allocation2 + $0x8] sm:$0xff] %vm439, %v436
          %s442 = smul.u32 %s24, 128
          %v443 = vstv %s442
          %v444 = vadd.s32 %v353, %v443
          %v445 = vadd.s32 %v444, 1
          %v446 = vcvt.s32.f32 %v445
          %448 = vset.pattern.permute.xlu0 0
          %449 = vperm.xlu0 %448, %v350
          %v450 = vpop.permute.xlu0 %449
          %453 = vset.pattern.permute.xlu0 0
          %454 = vperm.xlu0 %453, %v351
          %v455 = vpop.permute.xlu0 %454
          %v457 = vadd.f32 %v450, %v446
          %v458 = vadd.f32 %v455, %v446
          %v459 = vsub.f32 %v457, %v429
          %v460 = vsub.f32 %v458, %v430
          %v461 = vsub.f32 %v459, 1.0
          %v462 = vsub.f32 %v460, 1.0
          %v463 = vadd.f32 %v461, %v346
          %v464 = vadd.f32 %v462, %v347
          %vm465 = vcmp.eq.f32.partialorder %v463, 0.0
          %vm466 = vcmp.eq.f32.partialorder %v464, 0.0
          %v467 = vsub.f32 %v450, %v429
          %v468 = vsub.f32 %v455, %v430
          %v469 = vmul.f32 %v446, %v346
          %v470 = vmul.f32 %v446, %v347
          %v471 = vadd.f32 %v467, %v469
          %v472 = vadd.f32 %v468, %v470
          %v473 = vsel %vm465, 1.0, %v471
          %v474 = vsel %vm466, 1.0, %v472
          %v475 = vsel %vm465, 1.0, %v463
          %v476 = vsel %vm466, 1.0, %v464
          %v477 = vmul.f32 %v459, %v475
          %v478 = vmul.f32 %v460, %v476
          %v479 = vrcp.pop %v477
          %v480 = vmul.f32 %v473, %v479
          %v481 = vrcp.pop %v478
          %v482 = vmul.f32 %v474, %v481
          %v483 = vld [vmem:[%s328] sm:$0xff]
          %v484 = vld [vmem:[%s328 + $0x8] sm:$0xff]
          %v485 = vmul.f32 %v348, %v480
          %v486 = vmul.f32 %v349, %v482
          %487 = vadd.xlane.f32.xlu0 %v485
          %v488 = vpop.xlane.xlu0 %487
          %489 = vadd.xlane.f32.xlu0 %v486
          %v490 = vpop.xlane.xlu0 %489
          %v491 = vadd.f32 %v483, %v488
          %v492 = vadd.f32 %v484, %v490
          %493 = vst.msk [vmem:[%s328] sm:$0xff] %vm439, %v491
          %494 = vst.msk [vmem:[%s328 + $0x8] sm:$0xff] %vm439, %v492
        $region85: #{tpu_custom_call.1} parent=68 // pred_fallthru
          _
        %s495 = smul.u32 2, %s23
        %p496 = scmp.lt.s32.totalorder %s495, 1
        %s497 = scalar_select %p496, %s495, 1
        %s498 = smul.addr %s497, 8
        %s499 = scalar_lea.vmem %s4, %s498
        // Predicated region
        $region86: #{tpu_custom_call.1} parent=68 // pred_check
          %p500 = pneg %p143
        $region87: #{tpu_custom_call.1} parent=68 // pred_check_branch
          %502 = sbr.rel (%p500) target = $region89
        $region88: #{tpu_custom_call.1} parent=68 // pred_region
          %s503 = smul.u32 2, %s23
        $region89: #{tpu_custom_call.1} parent=68 // pred_fallthru
          _
        // Predicated region
        $region90: #{tpu_custom_call.1} parent=68 // pred_check
          %p504 = pneg %p143
        $region91: #{tpu_custom_call.1} parent=68 // pred_check_branch
          %506 = sbr.rel (%p504) target = $region93
        $region92: #{tpu_custom_call.1} parent=68 // pred_region
          %s507 = smul.u32 2, %s23
          %p508 = scmp.lt.s32.totalorder %s507, 1
          %s509 = scalar_select %p508, %s507, 1
          %s510 = smul.addr %s509, 8
          %s511 = scalar_lea.vmem %s4, %s510
        $region93: #{tpu_custom_call.1} parent=68 // pred_fallthru
          _
      $region69: #{tpu_custom_call.1} parent=5 // pred_fallthru
        _
      %p512 = scmp.le.s32.totalorder 2, %s14
      // Predicated region
      $region94: #{tpu_custom_call.1} parent=5 // pred_check
        %p513 = pneg %p512
      $region95: #{tpu_custom_call.1} parent=5 // pred_check_branch
        %515 = sbr.rel (%p513) target = $region97
      $region96: #{tpu_custom_call.1} parent=5 // pred_region
        %s516 = ssub.s32 %s14, 2
      $region97: #{tpu_custom_call.1} parent=5 // pred_fallthru
        _
    $region6: #{tpu_custom_call.1} parent=1 // loop_footer
      %s18 = sadd.s32 1, %s14
    $region7: #{tpu_custom_call.1} parent=1 // loop_footer_branch
      %13 = sbr.rel target = $region3
    $region8: #{tpu_custom_call.1} parent=1 // loop_exit
      _
    %517 = vsyncpa [#allocation6], 1
    %s518 = scalar_lea.sflag [#allocation6], 1
    %519 = vsyncpa %s518, 1

</llo_original>
